<compile_context>
chip_gen: v6e
topology: v6e:2x2x1
jax: 0.10.0
libtpu: 0.0.40
codegen_flags: <defaults>
</compile_context>

<pallas_src>
import functools

import jax
import jax.numpy as jnp
from jax import lax
from jax.experimental import pallas as pl
from jax.experimental.pallas import tpu as pltpu


_VMEM_LIMIT_BYTES = 32 * 1024 * 1024   # scoped VMEM budget; valid on v5e/v6e/v7x
_WRES_BUDGET_BYTES = 24 * 1024 * 1024  # headroom inside the limit for the resident-W path
_WRES_MAX_W_BYTES = 8 * 1024 * 1024    # single-buffer cap for the resident weight


def _round_up(x, m):
    return ((x + m - 1) // m) * m


def _cdiv(a, b):
    return (a + b - 1) // b


def _pad2d(a, rows, cols, dtype):
    """Cast + zero-pad in the target dtype; no-op (just a cast) when already aligned."""
    a = a.astype(dtype)
    r, c = a.shape
    if (r, c) == (rows, cols):
        return a
    return jnp.zeros((rows, cols), dtype).at[:r, :c].set(a)


def _maybe_split_m(tm, m_pad, M, other_parallel_blocks):
    """Keep >=2 blocks along a parallel axis so v7x's 2 TensorCores both get work."""
    if other_parallel_blocks >= 2 or m_pad < 256:
        return tm, m_pad
    tm_new = _round_up(_cdiv(m_pad, 2), 16)
    if tm_new >= tm:
        return tm, m_pad
    return tm_new, _round_up(M, tm_new)


# ----------------------------------------------------------------------------------
# Kernels
# ----------------------------------------------------------------------------------
def _dense_wres_kernel(x_ref, w_ref, b_ref, o_ref, *, apply_relu):
    # x: (tm, Kp) bf16, w: (Np, Kp) bf16 (torch layout), b: (1, Np) f32, o: (tm, Np)
    acc = lax.dot_general(
        x_ref[...], w_ref[...],
        dimension_numbers=(((1,), (1,)), ((), ())),   # x @ w.T, MXU trans_b form
        preferred_element_type=jnp.float32)
    h = acc + b_ref[...]
    if apply_relu:                                    # static (trace-time) flag
        h = jnp.maximum(h, 0.0)
    o_ref[...] = h.astype(o_ref.dtype)


def _dense_tiled_kernel(x_ref, w_ref, b_ref, o_ref, acc_ref, *, apply_relu):
    # x: (tm, tk) bf16, w: (tn, tk) bf16 (torch layout), b: (1, tn) f32, o: (tm, tn)
    # acc_ref: (tm, tn) f32 VMEM accumulator resident across the K axis
    k = pl.program_id(2)

    @pl.when(k == 0)
    def _():
        acc_ref[...] = jnp.zeros_like(acc_ref)

    acc_ref[...] += lax.dot_general(
        x_ref[...], w_ref[...],
        dimension_numbers=(((1,), (1,)), ((), ())),   # x @ w.T, MXU trans_b form
        preferred_element_type=jnp.float32)

    @pl.when(k == pl.num_programs(2) - 1)
    def _():
        h = acc_ref[...] + b_ref[...]                 # f32 epilogue
        if apply_relu:
            h = jnp.maximum(h, 0.0)
        o_ref[...] = h.astype(o_ref.dtype)


# ----------------------------------------------------------------------------------
# Wrapper
# ----------------------------------------------------------------------------------
def dense_forward(x, weight, bias, *, apply_relu=True, out_dtype=jnp.float32,
                  tm=512, tn=512, tk=1024, force_tiled=False):
    """y = relu(x @ weight.T + bias).  weight: [Dout, Din] (torch Linear layout)."""
    M, Din = x.shape
    Dout, Din_w = weight.shape
    assert Din_w == Din and bias.shape == (Dout,)

    out_itemsize = jnp.dtype(out_dtype).itemsize
    k_pad128 = _round_up(Din, 128)        # lane-dense contraction
    n_pad128 = _round_up(Dout, 128)       # lane-dense output

    # ---------------- weight-resident fast path decision ----------------
    use_wres = not force_tiled
    tm_w = None
    if use_wres:
        w_bytes = k_pad128 * n_pad128 * 2                       # bf16 W, single buffer
        if w_bytes > _WRES_MAX_W_BYTES:
            use_wres = False
        else:
            for cand in (tm, 256, 128):
                cand = min(cand, _round_up(M, 16))
                vmem = (2 * w_bytes                              # W (double-buffered)
                        + 2 * cand * k_pad128 * 2                # x tiles
                        + 2 * cand * n_pad128 * out_itemsize     # out tiles
                        + 2 * n_pad128 * 4)                      # bias
                if vmem <= _WRES_BUDGET_BYTES:
                    tm_w = cand
                    break
            if tm_w is None:
                use_wres = False

    if use_wres:
        # ---- single grid axis over rows; W read from HBM exactly once ----
        m_pad = _round_up(M, tm_w)
        tm_w, m_pad = _maybe_split_m(tm_w, m_pad, M, other_parallel_blocks=1)

        x_p = _pad2d(x, m_pad, k_pad128, jnp.bfloat16)
        w_p = _pad2d(weight, n_pad128, k_pad128, jnp.bfloat16)   # torch layout, no .T
        b_p = _pad2d(bias.reshape(1, Dout), 1, n_pad128, jnp.float32)

        out = pl.pallas_call(
            functools.partial(_dense_wres_kernel, apply_relu=apply_relu),
            out_shape=jax.ShapeDtypeStruct((m_pad, n_pad128), out_dtype),
            grid_spec=pltpu.PrefetchScalarGridSpec(
                num_scalar_prefetch=0,
                grid=(m_pad // tm_w,),
                in_specs=[
                    pl.BlockSpec((tm_w, k_pad128), lambda i: (i, 0)),
                    pl.BlockSpec((n_pad128, k_pad128), lambda i: (0, 0)),
                    pl.BlockSpec((1, n_pad128), lambda i: (0, 0)),
                ],
                out_specs=pl.BlockSpec((tm_w, n_pad128), lambda i: (i, 0)),
            ),
            compiler_params=pltpu.CompilerParams(
                dimension_semantics=("parallel",),
                vmem_limit_bytes=_VMEM_LIMIT_BYTES),
        )(x_p, w_p, b_p)
        m_out, n_out = m_pad, n_pad128

    else:
        # ---- general tiled path: K accumulated on its own (arbitrary) grid axis ----
        # Balanced tile sizes: as large as the defaults allow, minimal zero padding.
        m16 = _round_up(M, 16)
        tm_t = _round_up(_cdiv(m16, _cdiv(m16, tm)), 16)
        m_pad = _round_up(M, tm_t)

        tn_t = _round_up(_cdiv(n_pad128, _cdiv(n_pad128, tn)), 128)
        n_pad = _round_up(Dout, tn_t)

        tk_t = _round_up(_cdiv(k_pad128, _cdiv(k_pad128, tk)), 128)
        k_pad = _round_up(Din, tk_t)

        tm_t, m_pad = _maybe_split_m(tm_t, m_pad, M,
                                     other_parallel_blocks=n_pad // tn_t)

        x_p = _pad2d(x, m_pad, k_pad, jnp.bfloat16)
        w_p = _pad2d(weight, n_pad, k_pad, jnp.bfloat16)         # torch layout, no .T
        b_p = _pad2d(bias.reshape(1, Dout), 1, n_pad, jnp.float32)

        grid = (m_pad // tm_t, n_pad // tn_t, k_pad // tk_t)
        out = pl.pallas_call(
            functools.partial(_dense_tiled_kernel, apply_relu=apply_relu),
            out_shape=jax.ShapeDtypeStruct((m_pad, n_pad), out_dtype),
            grid_spec=pltpu.PrefetchScalarGridSpec(
                num_scalar_prefetch=0,
                grid=grid,
                in_specs=[
                    pl.BlockSpec((tm_t, tk_t), lambda i, j, k: (i, k)),  # x row/K block
                    pl.BlockSpec((tn_t, tk_t), lambda i, j, k: (j, k)),  # W col/K block
                    pl.BlockSpec((1, tn_t), lambda i, j, k: (0, j)),     # bias col block
                ],
                out_specs=pl.BlockSpec((tm_t, tn_t), lambda i, j, k: (i, j)),
                scratch_shapes=[pltpu.VMEM((tm_t, tn_t), jnp.float32)],
            ),
            compiler_params=pltpu.CompilerParams(
                dimension_semantics=("parallel", "parallel", "arbitrary"),
                vmem_limit_bytes=_VMEM_LIMIT_BYTES),
        )(x_p, w_p, b_p)
        m_out, n_out = m_pad, n_pad

    if (m_out, n_out) == (M, Dout):
        return out                       # no padding added -> no extra slice copy
    return out[:M, :Dout]


if __name__ == "__main__":
    # Small shapes, deliberately not tile-aligned to exercise the padding path.
    B, DIN, DOUT = 200, 160, 96
    key = jax.random.PRNGKey(0)
    kx, kw, kb = jax.random.split(key, 3)

    x = jax.random.normal(kx, (B, DIN), dtype=jnp.float32)
    # torch.nn.Linear default init: U(-1/sqrt(fan_in), 1/sqrt(fan_in))
    bound = 1.0 / (DIN ** 0.5)
    weight = jax.random.uniform(kw, (DOUT, DIN), minval=-bound, maxval=bound,
                                dtype=jnp.float32)
    bias = jax.random.uniform(kb, (DOUT,), minval=-bound, maxval=bound,
                              dtype=jnp.float32)

    # Reference with the same bf16 operand rounding (f32 accumulation) as the kernel.
    x_b = x.astype(jnp.bfloat16).astype(jnp.float32)
    w_b = weight.astype(jnp.bfloat16).astype(jnp.float32)
    ref = jnp.maximum(x_b @ w_b.T + bias[None, :], 0.0)

    # Weight-resident fast path (default for these GNN-sized layers).
    y = jax.block_until_ready(dense_forward(x, weight, bias, apply_relu=True))
    assert y.shape == (B, DOUT)
    assert jnp.allclose(y, ref, atol=1e-4, rtol=1e-4), "wres path mismatch vs reference"

    # General K-tiled path, exercised explicitly at the same small shapes.
    y_t = jax.block_until_ready(
        dense_forward(x, weight, bias, apply_relu=True, force_tiled=True))
    assert y_t.shape == (B, DOUT)
    assert jnp.allclose(y_t, ref, atol=1e-4, rtol=1e-4), "tiled path mismatch vs reference"

    # Sanity vs full-f32 math (difference is only bf16 operand rounding).
    ref_f32 = jnp.maximum(x @ weight.T + bias[None, :], 0.0)
    assert jnp.allclose(y, ref_f32, atol=5e-2, rtol=5e-2), "bf16 rounding out of bounds"

    print("KERNEL_OK")
</pallas_src>

<mosaic_0001>
module attributes {stable_mosaic.version = 11 : i64} {
  func.func @_dense_wres_kernel(%arg0: i32, %arg1: memref<208x256xbf16, #tpu.memory_space<vmem>>, %arg2: memref<128x256xbf16, #tpu.memory_space<vmem>>, %arg3: memref<1x128xf32, #tpu.memory_space<vmem>>, %arg4: memref<208x128xf32, #tpu.memory_space<vmem>>) attributes {dimension_semantics = [#tpu.dimension_semantics<parallel>], iteration_bounds = array<i64: 1>, scalar_prefetch = 0 : i64, scratch_operands = 0 : i64, tpu.core_type = #tpu.core_type<tc>, window_params = [{transform_indices = @transform_0, window_bounds = array<i64: 208, 256>}, {pipeline_mode = #tpu.pipeline_mode<synchronous>, transform_indices = @transform_1, window_bounds = array<i64: 128, 256>}, {pipeline_mode = #tpu.pipeline_mode<synchronous>, transform_indices = @transform_2, window_bounds = array<i64: 1, 128>}, {transform_indices = @transform_3, window_bounds = array<i64: 208, 128>}]} {
    %c0 = arith.constant 0 : index
    %c0_0 = arith.constant 0 : index
    %0 = vector.load %arg1[%c0, %c0_0] : memref<208x256xbf16, #tpu.memory_space<vmem>>, vector<208x256xbf16>
    %c0_1 = arith.constant 0 : index
    %c0_2 = arith.constant 0 : index
    %1 = vector.load %arg2[%c0_1, %c0_2] : memref<128x256xbf16, #tpu.memory_space<vmem>>, vector<128x256xbf16>
    %cst = arith.constant dense<0.000000e+00> : vector<208x128xf32>
    %2 = tpu.matmul %0, %1, %cst {dimension_numbers = #tpu.dot_dimension_numbers<[1], [1], [0], [0], [0, 0, 1, 0], [], []>} : vector<208x256xbf16>, vector<128x256xbf16>, vector<208x128xf32> -> vector<208x128xf32>
    %c0_3 = arith.constant 0 : index
    %c0_4 = arith.constant 0 : index
    %3 = vector.load %arg3[%c0_3, %c0_4] : memref<1x128xf32, #tpu.memory_space<vmem>>, vector<1x128xf32>
    %4 = vector.broadcast %3 : vector<1x128xf32> to vector<208x128xf32>
    %5 = arith.addf %2, %4 : vector<208x128xf32>
    %cst_5 = arith.constant 0.000000e+00 : f32
    %6 = vector.broadcast %cst_5 : f32 to vector<208x128xf32>
    %7 = arith.maximumf %5, %6 : vector<208x128xf32>
    %c0_6 = arith.constant 0 : index
    %c0_7 = arith.constant 0 : index
    %8 = vector.load %arg4[%c0_6, %c0_7] : memref<208x128xf32, #tpu.memory_space<vmem>>, vector<208x128xf32>
    tpu.vector_store %arg4[%c0_6, %c0_7], %7 {strides = array<i32>} : memref<208x128xf32, #tpu.memory_space<vmem>>, vector<208x128xf32>,
    return
  }
  func.func @transform_0(%arg0: i32) -> (i32, i32) {
    %c0_i32 = arith.constant 0 : i32
    %c0_i32_0 = arith.constant 0 : i32
    return %arg0, %c0_i32 : i32, i32
  }
  func.func @transform_1(%arg0: i32) -> (i32, i32) {
    %c0_i32 = arith.constant 0 : i32
    %c0_i32_0 = arith.constant 0 : i32
    %c0_i32_1 = arith.constant 0 : i32
    return %c0_i32, %c0_i32_0 : i32, i32
  }
  func.func @transform_2(%arg0: i32) -> (i32, i32) {
    %c0_i32 = arith.constant 0 : i32
    %c0_i32_0 = arith.constant 0 : i32
    %c0_i32_1 = arith.constant 0 : i32
    return %c0_i32, %c0_i32_0 : i32, i32
  }
  func.func @transform_3(%arg0: i32) -> (i32, i32) {
    %c0_i32 = arith.constant 0 : i32
    %c0_i32_0 = arith.constant 0 : i32
    return %arg0, %c0_i32 : i32, i32
  }
}

</mosaic_0001>

<llo_original>
// kernel: tpu_custom_call.1
$region0: #{tpu_custom_call.1}
  #allocation0 [shape = 'u32[]', space=smem, size = 0x4, offset = 0x4, fixed_abs, tag = 'smem constant byte address 0x4 - core index']
  #allocation1 [shape = 'u32[144,128]{1,0:T(1,128)}', space=vmem, size = 0x12000, scoped, tag = 'internal scratch']
  %s0 = inlined_call_operand.hbm [shape: bf16[208,256], index: 0, kind: input, shape index: {}]
  %s1 = inlined_call_operand.hbm [shape: bf16[128,256], index: 1, kind: input, shape index: {}]
  %s2 = inlined_call_operand.vmem [shape: f32[1,128], index: 2, kind: input, shape index: {}]
  %s3 = inlined_call_operand.hbm [shape: f32[208,128], index: 3, kind: output, shape index: {}]
  %s4 = sld [smem:[#allocation0]]
  $region30: #{tpu_custom_call.1} parent=0
    _
  %s6 = ssub.s32 1, %s4
  %s7 = scalar_select 0, %s6, %s4
  $region1: #{tpu_custom_call.1} parent=0
    #allocation2 [shape = 'u8[106496]{0}', space=vmem, size = 0x1a000, scoped, tag = 'input window, operand 0, single buffered']
    #allocation3 [shape = 's32[1]{0}', space=sflag, size = 0x4, scoped, tag = 'scoped memory for tpu_custom_call.1']
    #allocation4 [shape = 's32[1]{0}', space=sflag, size = 0x4, scoped, tag = 'scoped memory for tpu_custom_call.1']
    #allocation5 [shape = 'u8[65536]{0}', space=vmem, size = 0x10000, scoped, tag = 'input window, operand 1, single buffered']
    #allocation6 [shape = 's32[1]{0}', space=sflag, size = 0x4, scoped, tag = 'scoped memory for tpu_custom_call.1']
    #allocation7 [shape = 'u8[106496]{0}', space=vmem, size = 0x1a000, scoped, tag = 'output window, operand 0, single buffered']
    %8 = vsyncpa [#allocation3], 0
    %9 = vsyncpa [#allocation6], 0
    %10 = vsyncpa [#allocation4], 0
    // Predicated region
    $region2: #{tpu_custom_call.1} parent=1 // pred_check
      _
    $region3: #{tpu_custom_call.1} parent=1 // pred_check_branch
      %12 = sbr.rel (0) target = $region5
    $region4: #{tpu_custom_call.1} parent=1 // pred_region
      %s14 = ssub.s32 3328, 3328
      %15 = vsyncadd [#allocation3], %s14
      %s16 = sshll.u32 [#allocation2], 4
      %s17 = int_to_ptr.vmem [resolvable:$true] %s16
      %22 = dma.hbm_to_vmem [thread:$0]  %s0, 3328, %s17, [#allocation3], 128, 128, 8
    $region5: #{tpu_custom_call.1} parent=1 // pred_fallthru
      _
    // Predicated region
    $region6: #{tpu_custom_call.1} parent=1 // pred_check
      _
    $region7: #{tpu_custom_call.1} parent=1 // pred_check_branch
      %24 = sbr.rel (0) target = $region9
    $region8: #{tpu_custom_call.1} parent=1 // pred_region
      %s26 = ssub.s32 2048, 2048
      %27 = vsyncadd [#allocation6], %s26
      %s28 = sshll.u32 [#allocation5], 4
      %s29 = int_to_ptr.vmem [resolvable:$true] %s28
      %34 = dma.hbm_to_vmem [thread:$0]  %s1, 2048, %s29, [#allocation6], 128, 128, 8
    $region9: #{tpu_custom_call.1} parent=1 // pred_fallthru
      _
    // Predicated region
    $region10: #{tpu_custom_call.1} parent=1 // pred_check
      _
    $region11: #{tpu_custom_call.1} parent=1 // pred_check_branch
      %36 = sbr.rel (0) target = $region13
    $region12: #{tpu_custom_call.1} parent=1 // pred_region
      _
    $region13: #{tpu_custom_call.1} parent=1 // pred_fallthru
      _
    // Predicated region
    $region14: #{tpu_custom_call.1} parent=1 // pred_check
      _
    $region15: #{tpu_custom_call.1} parent=1 // pred_check_branch
      %38 = sbr.rel (0) target = $region17
    $region16: #{tpu_custom_call.1} parent=1 // pred_region
      %39 = dma.done [#allocation3], 3328
    $region17: #{tpu_custom_call.1} parent=1 // pred_fallthru
      _
    // Predicated region
    $region18: #{tpu_custom_call.1} parent=1 // pred_check
      _
    $region19: #{tpu_custom_call.1} parent=1 // pred_check_branch
      %41 = sbr.rel (0) target = $region21
    $region20: #{tpu_custom_call.1} parent=1 // pred_region
      %42 = dma.done [#allocation6], 2048
    $region21: #{tpu_custom_call.1} parent=1 // pred_fallthru
      _
    %v44 = vld [vmem:[#allocation2] sm:$0xff]
    %v45 = vld [vmem:[#allocation2 + $0x8] sm:$0xff]
    %v46 = vld [vmem:[#allocation2 + $0x10] sm:$0xff]
    %v47 = vld [vmem:[#allocation2 + $0x18] sm:$0xff]
    %v48 = vld [vmem:[#allocation2 + $0x20] sm:$0xff]
    %v49 = vld [vmem:[#allocation2 + $0x28] sm:$0xff]
    %v50 = vld [vmem:[#allocation2 + $0x30] sm:$0xff]
    %v51 = vld [vmem:[#allocation2 + $0x38] sm:$0xff]
    %v52 = vld [vmem:[#allocation2 + $0x40] sm:$0xff]
    %v53 = vld [vmem:[#allocation2 + $0x48] sm:$0xff]
    %v54 = vld [vmem:[#allocation2 + $0x50] sm:$0xff]
    %v55 = vld [vmem:[#allocation2 + $0x58] sm:$0xff]
    %v56 = vld [vmem:[#allocation2 + $0x60] sm:$0xff]
    %v57 = vld [vmem:[#allocation2 + $0x68] sm:$0xff]
    %v58 = vld [vmem:[#allocation2 + $0x70] sm:$0xff]
    %v59 = vld [vmem:[#allocation2 + $0x78] sm:$0xff]
    %v60 = vld [vmem:[#allocation2 + $0x80] sm:$0xff]
    %v61 = vld [vmem:[#allocation2 + $0x88] sm:$0xff]
    %v62 = vld [vmem:[#allocation2 + $0x90] sm:$0xff]
    %v63 = vld [vmem:[#allocation2 + $0x98] sm:$0xff]
    %v64 = vld [vmem:[#allocation2 + $0xa0] sm:$0xff]
    %v65 = vld [vmem:[#allocation2 + $0xa8] sm:$0xff]
    %v66 = vld [vmem:[#allocation2 + $0xb0] sm:$0xff]
    %v67 = vld [vmem:[#allocation2 + $0xb8] sm:$0xff]
    %v68 = vld [vmem:[#allocation2 + $0xc0] sm:$0xff]
    %v69 = vld [vmem:[#allocation2 + $0xc8] sm:$0xff]
    %v70 = vld [vmem:[#allocation5] sm:$0xff]
    %v71 = vld [vmem:[#allocation5 + $0x8] sm:$0xff]
    %v72 = vld [vmem:[#allocation5 + $0x10] sm:$0xff]
    %v73 = vld [vmem:[#allocation5 + $0x18] sm:$0xff]
    %v74 = vld [vmem:[#allocation5 + $0x20] sm:$0xff]
    %v75 = vld [vmem:[#allocation5 + $0x28] sm:$0xff]
    %v76 = vld [vmem:[#allocation5 + $0x30] sm:$0xff]
    %v77 = vld [vmem:[#allocation5 + $0x38] sm:$0xff]
    %v78 = vld [vmem:[#allocation5 + $0x40] sm:$0xff]
    %v79 = vld [vmem:[#allocation5 + $0x48] sm:$0xff]
    %v80 = vld [vmem:[#allocation5 + $0x50] sm:$0xff]
    %v81 = vld [vmem:[#allocation5 + $0x58] sm:$0xff]
    %v82 = vld [vmem:[#allocation5 + $0x60] sm:$0xff]
    %v83 = vld [vmem:[#allocation5 + $0x68] sm:$0xff]
    %v84 = vld [vmem:[#allocation5 + $0x70] sm:$0xff]
    %v85 = vld [vmem:[#allocation5 + $0x78] sm:$0xff]
    %v86 = vld [vmem:[%s2] sm:$0x1]
    %v88 = vlaneseq
    %v89 = vshrl.u32 %v88, 7
    %v90 = vsub.s32 0, %v89
    %v91 = vrot.slane %v86, %v90
    %v119 = vunpack.c.l.b16 %v44
    %v120 = vunpack.c.h.b16 %v44
    %v121 = vunpack.c.l.b16 %v45
    %v122 = vunpack.c.h.b16 %v45
    %v123 = vunpack.c.l.b16 %v46
    %v124 = vunpack.c.h.b16 %v46
    %v125 = vunpack.c.l.b16 %v47
    %v126 = vunpack.c.h.b16 %v47
    %v127 = vunpack.c.l.b16 %v48
    %v128 = vunpack.c.h.b16 %v48
    %v129 = vunpack.c.l.b16 %v49
    %v130 = vunpack.c.h.b16 %v49
    %v131 = vunpack.c.l.b16 %v50
    %v132 = vunpack.c.h.b16 %v50
    %v133 = vunpack.c.l.b16 %v51
    %v134 = vunpack.c.h.b16 %v51
    %v135 = vunpack.c.l.b16 %v52
    %v136 = vunpack.c.h.b16 %v52
    %v137 = vunpack.c.l.b16 %v53
    %v138 = vunpack.c.h.b16 %v53
    %v139 = vunpack.c.l.b16 %v54
    %v140 = vunpack.c.h.b16 %v54
    %v141 = vunpack.c.l.b16 %v55
    %v142 = vunpack.c.h.b16 %v55
    %v143 = vunpack.c.l.b16 %v56
    %v144 = vunpack.c.h.b16 %v56
    %v145 = vunpack.c.l.b16 %v57
    %v146 = vunpack.c.h.b16 %v57
    %v147 = vunpack.c.l.b16 %v58
    %v148 = vunpack.c.h.b16 %v58
    %v149 = vunpack.c.l.b16 %v59
    %v150 = vunpack.c.h.b16 %v59
    %v151 = vunpack.c.l.b16 %v60
    %v152 = vunpack.c.h.b16 %v60
    %v153 = vunpack.c.l.b16 %v61
    %v154 = vunpack.c.h.b16 %v61
    %v155 = vunpack.c.l.b16 %v62
    %v156 = vunpack.c.h.b16 %v62
    %v157 = vunpack.c.l.b16 %v63
    %v158 = vunpack.c.h.b16 %v63
    %v159 = vunpack.c.l.b16 %v64
    %v160 = vunpack.c.h.b16 %v64
    %v161 = vunpack.c.l.b16 %v65
    %v162 = vunpack.c.h.b16 %v65
    %v163 = vunpack.c.l.b16 %v66
    %v164 = vunpack.c.h.b16 %v66
    %v165 = vunpack.c.l.b16 %v67
    %v166 = vunpack.c.h.b16 %v67
    %v167 = vunpack.c.l.b16 %v68
    %v168 = vunpack.c.h.b16 %v68
    %v169 = vunpack.c.l.b16 %v69
    %v170 = vunpack.c.h.b16 %v69
    %v171 = vpack.c.b16 %v121, %v119
    %v172 = vpack.c.b16 %v122, %v120
    %v173 = vpack.c.b16 %v125, %v123
    %v174 = vpack.c.b16 %v126, %v124
    %v175 = vpack.c.b16 %v129, %v127
    %v176 = vpack.c.b16 %v130, %v128
    %v177 = vpack.c.b16 %v133, %v131
    %v178 = vpack.c.b16 %v134, %v132
    %v179 = vpack.c.b16 %v137, %v135
    %v180 = vpack.c.b16 %v138, %v136
    %v181 = vpack.c.b16 %v141, %v139
    %v182 = vpack.c.b16 %v142, %v140
    %v183 = vpack.c.b16 %v145, %v143
    %v184 = vpack.c.b16 %v146, %v144
    %v185 = vpack.c.b16 %v149, %v147
    %v186 = vpack.c.b16 %v150, %v148
    %v187 = vpack.c.b16 %v153, %v151
    %v188 = vpack.c.b16 %v154, %v152
    %v189 = vpack.c.b16 %v157, %v155
    %v190 = vpack.c.b16 %v158, %v156
    %v191 = vpack.c.b16 %v161, %v159
    %v192 = vpack.c.b16 %v162, %v160
    %v193 = vpack.c.b16 %v165, %v163
    %v194 = vpack.c.b16 %v166, %v164
    %v195 = vpack.c.b16 %v169, %v167
    %v196 = vpack.c.b16 %v170, %v168
    %v239 = vunpack.c.l.b16 %v70
    %v240 = vunpack.c.h.b16 %v70
    %v241 = vunpack.c.l.b16 %v71
    %v242 = vunpack.c.h.b16 %v71
    %v243 = vunpack.c.l.b16 %v72
    %v244 = vunpack.c.h.b16 %v72
    %v245 = vunpack.c.l.b16 %v73
    %v246 = vunpack.c.h.b16 %v73
    %v247 = vunpack.c.l.b16 %v74
    %v248 = vunpack.c.h.b16 %v74
    %v249 = vunpack.c.l.b16 %v75
    %v250 = vunpack.c.h.b16 %v75
    %v251 = vunpack.c.l.b16 %v76
    %v252 = vunpack.c.h.b16 %v76
    %v253 = vunpack.c.l.b16 %v77
    %v254 = vunpack.c.h.b16 %v77
    %v255 = vunpack.c.l.b16 %v78
    %v256 = vunpack.c.h.b16 %v78
    %v257 = vunpack.c.l.b16 %v79
    %v258 = vunpack.c.h.b16 %v79
    %v259 = vunpack.c.l.b16 %v80
    %v260 = vunpack.c.h.b16 %v80
    %v261 = vunpack.c.l.b16 %v81
    %v262 = vunpack.c.h.b16 %v81
    %v263 = vunpack.c.l.b16 %v82
    %v264 = vunpack.c.h.b16 %v82
    %v265 = vunpack.c.l.b16 %v83
    %v266 = vunpack.c.h.b16 %v83
    %v267 = vunpack.c.l.b16 %v84
    %v268 = vunpack.c.h.b16 %v84
    %v269 = vunpack.c.l.b16 %v85
    %v270 = vunpack.c.h.b16 %v85
    %v271 = vpack.c.b16 %v241, %v239
    %v272 = vpack.c.b16 %v242, %v240
    %v273 = vpack.c.b16 %v245, %v243
    %v274 = vpack.c.b16 %v246, %v244
    %v275 = vpack.c.b16 %v249, %v247
    %v276 = vpack.c.b16 %v250, %v248
    %v277 = vpack.c.b16 %v253, %v251
    %v278 = vpack.c.b16 %v254, %v252
    %v279 = vpack.c.b16 %v257, %v255
    %v280 = vpack.c.b16 %v258, %v256
    %v281 = vpack.c.b16 %v261, %v259
    %v282 = vpack.c.b16 %v262, %v260
    %v283 = vpack.c.b16 %v265, %v263
    %v284 = vpack.c.b16 %v266, %v264
    %v285 = vpack.c.b16 %v269, %v267
    %v286 = vpack.c.b16 %v270, %v268
    %303 = vmatprep.subr.bf16.mxu0 %v286
    %304 = vmatpush1.bf16.xpose.msra.mxu0 %v285
    %305 = vmatprep.subr.bf16.mxu0 %v284
    %306 = vmatpush1.bf16.xpose.msra.mxu0 %v283
    %307 = vmatprep.subr.bf16.mxu0 %v282
    %308 = vmatpush1.bf16.xpose.msra.mxu0 %v281
    %309 = vmatprep.subr.bf16.mxu0 %v280
    %310 = vmatpush1.bf16.xpose.msra.mxu0 %v279
    %311 = vmatprep.subr.bf16.mxu0 %v278
    %312 = vmatpush1.bf16.xpose.msra.mxu0 %v277
    %313 = vmatprep.subr.bf16.mxu0 %v276
    %314 = vmatpush1.bf16.xpose.msra.mxu0 %v275
    %315 = vmatprep.subr.bf16.mxu0 %v274
    %316 = vmatpush1.bf16.xpose.msra.mxu0 %v273
    %317 = vmatprep.subr.bf16.mxu0 %v272
    %318 = vmatpush1.bf16.xpose.msra.mxu0 %v271
    %319 = vmatprep.subr.bf16.mxu0 0
    %320 = vmatpush2.bf16.xpose.msra.mxu0 0
    %321 = vmatprep.subr.bf16.mxu0 0
    %322 = vmatpush2.bf16.xpose.msra.mxu0 0
    %323 = vmatprep.subr.bf16.mxu0 0
    %324 = vmatpush2.bf16.xpose.msra.mxu0 0
    %325 = vmatprep.subr.bf16.mxu0 0
    %326 = vmatpush2.bf16.xpose.msra.mxu0 0
    %327 = vmatprep.subr.bf16.mxu0 0
    %328 = vmatpush2.bf16.xpose.msra.mxu0 0
    %329 = vmatprep.subr.bf16.mxu0 0
    %330 = vmatpush2.bf16.xpose.msra.mxu0 0
    %331 = vmatprep.subr.bf16.mxu0 0
    %332 = vmatpush2.bf16.xpose.msra.mxu0 0
    %333 = vmatprep.subr.bf16.mxu0 0
    %334 = vmatpush2.bf16.xpose.msra.mxu0 0
    %335 = vmatprep.mubr.bf16.mxu0 %v172
    %336 = vmatmul.mubr.bf16.gmra.mxu0 %v171
    %v337 = vpop.f32.mrf.mxu0
    %v338 = vadd.f32 %v91, %v337
    %v339 = vpop.f32.mrf.mxu0
    %v340 = vpop.f32.mrf.mxu0
    %v341 = vadd.f32 %v91, %v340
    %v342 = vpop.f32.mrf.mxu0
    %343 = vmatprep.mubr.bf16.mxu0 %v174
    %344 = vmatmul.mubr.bf16.gmra.mxu0 %v173
    %v345 = vpop.f32.mrf.mxu0
    %v346 = vadd.f32 %v91, %v345
    %v347 = vpop.f32.mrf.mxu0
    %v348 = vpop.f32.mrf.mxu0
    %v349 = vadd.f32 %v91, %v348
    %v350 = vpop.f32.mrf.mxu0
    %351 = vmatprep.mubr.bf16.mxu0 %v176
    %352 = vmatmul.mubr.bf16.gmra.mxu0 %v175
    %v353 = vpop.f32.mrf.mxu0
    %v354 = vadd.f32 %v91, %v353
    %v355 = vpop.f32.mrf.mxu0
    %v356 = vpop.f32.mrf.mxu0
    %v357 = vadd.f32 %v91, %v356
    %v358 = vpop.f32.mrf.mxu0
    %359 = vmatprep.mubr.bf16.mxu0 %v178
    %360 = vmatmul.mubr.bf16.gmra.mxu0 %v177
    %v361 = vpop.f32.mrf.mxu0
    %v362 = vadd.f32 %v91, %v361
    %v363 = vpop.f32.mrf.mxu0
    %v364 = vpop.f32.mrf.mxu0
    %v365 = vadd.f32 %v91, %v364
    %v366 = vpop.f32.mrf.mxu0
    %367 = vmatprep.mubr.bf16.mxu0 %v180
    %368 = vmatmul.mubr.bf16.gmra.mxu0 %v179
    %v369 = vpop.f32.mrf.mxu0
    %v370 = vadd.f32 %v91, %v369
    %v371 = vpop.f32.mrf.mxu0
    %v372 = vpop.f32.mrf.mxu0
    %v373 = vadd.f32 %v91, %v372
    %v374 = vpop.f32.mrf.mxu0
    %375 = vmatprep.mubr.bf16.mxu0 %v182
    %376 = vmatmul.mubr.bf16.gmra.mxu0 %v181
    %v377 = vpop.f32.mrf.mxu0
    %v378 = vadd.f32 %v91, %v377
    %v379 = vpop.f32.mrf.mxu0
    %v380 = vpop.f32.mrf.mxu0
    %v381 = vadd.f32 %v91, %v380
    %v382 = vpop.f32.mrf.mxu0
    %383 = vmatprep.mubr.bf16.mxu0 %v184
    %384 = vmatmul.mubr.bf16.gmra.mxu0 %v183
    %v385 = vpop.f32.mrf.mxu0
    %v386 = vadd.f32 %v91, %v385
    %v387 = vpop.f32.mrf.mxu0
    %v388 = vpop.f32.mrf.mxu0
    %v389 = vadd.f32 %v91, %v388
    %v390 = vpop.f32.mrf.mxu0
    %391 = vmatprep.mubr.bf16.mxu0 %v186
    %392 = vmatmul.mubr.bf16.gmra.mxu0 %v185
    %v393 = vpop.f32.mrf.mxu0
    %v394 = vadd.f32 %v91, %v393
    %v395 = vpop.f32.mrf.mxu0
    %v396 = vpop.f32.mrf.mxu0
    %v397 = vadd.f32 %v91, %v396
    %v398 = vpop.f32.mrf.mxu0
    %399 = vmatprep.mubr.bf16.mxu0 %v188
    %400 = vmatmul.mubr.bf16.gmra.mxu0 %v187
    %v401 = vpop.f32.mrf.mxu0
    %v402 = vadd.f32 %v91, %v401
    %v403 = vpop.f32.mrf.mxu0
    %v404 = vpop.f32.mrf.mxu0
    %v405 = vadd.f32 %v91, %v404
    %v406 = vpop.f32.mrf.mxu0
    %407 = vmatprep.mubr.bf16.mxu0 %v190
    %408 = vmatmul.mubr.bf16.gmra.mxu0 %v189
    %v409 = vpop.f32.mrf.mxu0
    %v410 = vadd.f32 %v91, %v409
    %v411 = vpop.f32.mrf.mxu0
    %v412 = vpop.f32.mrf.mxu0
    %v413 = vadd.f32 %v91, %v412
    %v414 = vpop.f32.mrf.mxu0
    %415 = vmatprep.mubr.bf16.mxu0 %v192
    %416 = vmatmul.mubr.bf16.gmra.mxu0 %v191
    %v417 = vpop.f32.mrf.mxu0
    %v418 = vadd.f32 %v91, %v417
    %v419 = vpop.f32.mrf.mxu0
    %v420 = vpop.f32.mrf.mxu0
    %v421 = vadd.f32 %v91, %v420
    %v422 = vpop.f32.mrf.mxu0
    %423 = vmatprep.mubr.bf16.mxu0 %v194
    %424 = vmatmul.mubr.bf16.gmra.mxu0 %v193
    %v425 = vpop.f32.mrf.mxu0
    %v426 = vadd.f32 %v91, %v425
    %v427 = vpop.f32.mrf.mxu0
    %v428 = vpop.f32.mrf.mxu0
    %v429 = vadd.f32 %v91, %v428
    %v430 = vpop.f32.mrf.mxu0
    %431 = vmatprep.mubr.bf16.mxu0 %v196
    %432 = vmatmul.mubr.bf16.gmra.mxu0 %v195
    %v433 = vpop.f32.mrf.mxu0
    %v434 = vadd.f32 %v91, %v433
    %v435 = vpop.f32.mrf.mxu0
    %v436 = vpop.f32.mrf.mxu0
    %v437 = vadd.f32 %v91, %v436
    %v438 = vpop.f32.mrf.mxu0
    %439 = vdwg.mxu0
    %v440 = vmax.f32 %v338, 0.0
    %v441 = vmax.f32 %v341, 0.0
    %v442 = vmax.f32 %v346, 0.0
    %v443 = vmax.f32 %v349, 0.0
    %v444 = vmax.f32 %v354, 0.0
    %v445 = vmax.f32 %v357, 0.0
    %v446 = vmax.f32 %v362, 0.0
    %v447 = vmax.f32 %v365, 0.0
    %v448 = vmax.f32 %v370, 0.0
    %v449 = vmax.f32 %v373, 0.0
    %v450 = vmax.f32 %v378, 0.0
    %v451 = vmax.f32 %v381, 0.0
    %v452 = vmax.f32 %v386, 0.0
    %v453 = vmax.f32 %v389, 0.0
    %v454 = vmax.f32 %v394, 0.0
    %v455 = vmax.f32 %v397, 0.0
    %v456 = vmax.f32 %v402, 0.0
    %v457 = vmax.f32 %v405, 0.0
    %v458 = vmax.f32 %v410, 0.0
    %v459 = vmax.f32 %v413, 0.0
    %v460 = vmax.f32 %v418, 0.0
    %v461 = vmax.f32 %v421, 0.0
    %v462 = vmax.f32 %v426, 0.0
    %v463 = vmax.f32 %v429, 0.0
    %v464 = vmax.f32 %v434, 0.0
    %v465 = vmax.f32 %v437, 0.0
    %466 = vst [vmem:[#allocation7] sm:$0xff] %v440
    %467 = vst [vmem:[#allocation7 + $0x8] sm:$0xff] %v441
    %468 = vst [vmem:[#allocation7 + $0x10] sm:$0xff] %v442
    %469 = vst [vmem:[#allocation7 + $0x18] sm:$0xff] %v443
    %470 = vst [vmem:[#allocation7 + $0x20] sm:$0xff] %v444
    %471 = vst [vmem:[#allocation7 + $0x28] sm:$0xff] %v445
    %472 = vst [vmem:[#allocation7 + $0x30] sm:$0xff] %v446
    %473 = vst [vmem:[#allocation7 + $0x38] sm:$0xff] %v447
    %474 = vst [vmem:[#allocation7 + $0x40] sm:$0xff] %v448
    %475 = vst [vmem:[#allocation7 + $0x48] sm:$0xff] %v449
    %476 = vst [vmem:[#allocation7 + $0x50] sm:$0xff] %v450
    %477 = vst [vmem:[#allocation7 + $0x58] sm:$0xff] %v451
    %478 = vst [vmem:[#allocation7 + $0x60] sm:$0xff] %v452
    %479 = vst [vmem:[#allocation7 + $0x68] sm:$0xff] %v453
    %480 = vst [vmem:[#allocation7 + $0x70] sm:$0xff] %v454
    %481 = vst [vmem:[#allocation7 + $0x78] sm:$0xff] %v455
    %482 = vst [vmem:[#allocation7 + $0x80] sm:$0xff] %v456
    %483 = vst [vmem:[#allocation7 + $0x88] sm:$0xff] %v457
    %484 = vst [vmem:[#allocation7 + $0x90] sm:$0xff] %v458
    %485 = vst [vmem:[#allocation7 + $0x98] sm:$0xff] %v459
    %486 = vst [vmem:[#allocation7 + $0xa0] sm:$0xff] %v460
    %487 = vst [vmem:[#allocation7 + $0xa8] sm:$0xff] %v461
    %488 = vst [vmem:[#allocation7 + $0xb0] sm:$0xff] %v462
    %489 = vst [vmem:[#allocation7 + $0xb8] sm:$0xff] %v463
    %490 = vst [vmem:[#allocation7 + $0xc0] sm:$0xff] %v464
    %491 = vst [vmem:[#allocation7 + $0xc8] sm:$0xff] %v465
    // Predicated region
    $region22: #{tpu_custom_call.1} parent=1 // pred_check
      _
    $region23: #{tpu_custom_call.1} parent=1 // pred_check_branch
      %493 = sbr.rel (0) target = $region25
    $region24: #{tpu_custom_call.1} parent=1 // pred_region
      %s495 = ssub.s32 3328, 3328
      %496 = vsyncadd [#allocation4], %s495
      %s497 = sshll.u32 [#allocation7], 4
      %s498 = int_to_ptr.vmem [resolvable:$true] %s497
      %503 = dma.vmem_to_hbm [thread:$0]  %s498, 3328, %s3, [#allocation4], 128, 128, 8
    $region25: #{tpu_custom_call.1} parent=1 // pred_fallthru
      _
    // Predicated region
    $region26: #{tpu_custom_call.1} parent=1 // pred_check
      _
    $region27: #{tpu_custom_call.1} parent=1 // pred_check_branch
      %505 = sbr.rel (0) target = $region29
    $region28: #{tpu_custom_call.1} parent=1 // pred_region
      %506 = dma.done [#allocation4], 3328
    $region29: #{tpu_custom_call.1} parent=1 // pred_fallthru
      _
    %507 = vsyncpa [#allocation3], 1
    %508 = vsyncpa [#allocation6], 1
    %509 = vsyncpa [#allocation4], 1

</llo_original>
